<compile_context>
chip_gen: v7x
topology: tpu7x:2x2x1
jax: 0.10.0
libtpu: 0.0.40
codegen_flags: <defaults>
</compile_context>

<pallas_src>
import jax
import jax.numpy as jnp
from jax.experimental import pallas as pl
from jax.experimental.pallas import tpu as pltpu


# ------------------------------------------------------------------ kernel

def skff_kernel(x_ref, wdu_ref, wfc_ref, prelu_ref, o_ref):
    """Fused SKFF for one batch element.

    x_ref    : (1, height, C, HW)  stacked input features (channel-major, HW on lanes)
    wdu_ref  : (d, C)              conv_du 1x1 weight (bias=False)
    wfc_ref  : (height, C, d)      stacked fcs 1x1 weights (bias=False)
    prelu_ref: (1,) in SMEM        PReLU slope (single shared parameter)
    o_ref    : (1, C, HW)          fused output features
    """
    height = x_ref.shape[1]
    HW = x_ref.shape[3]

    # feats_U = sum over height  ->  global average pool over HW.
    u = x_ref[0, 0]
    for h in range(1, height):
        u = u + x_ref[0, h]                                   # (C, HW)
    s = jnp.sum(u, axis=-1, keepdims=True) * (1.0 / HW)       # (C, 1)

    # conv_du (1x1, C -> d) + PReLU.
    z = jnp.dot(wdu_ref[...], s, preferred_element_type=jnp.float32)   # (d, 1)
    slope = prelu_ref[0]
    z = jnp.where(z >= 0.0, z, slope * z)

    # fcs: per-height attention logits (d -> C), softmax over height.
    logits = [
        jnp.dot(wfc_ref[h], z, preferred_element_type=jnp.float32)     # (C, 1)
        for h in range(height)
    ]
    m = logits[0]
    for h in range(1, height):
        m = jnp.maximum(m, logits[h])
    exps = [jnp.exp(l - m) for l in logits]
    denom = exps[0]
    for h in range(1, height):
        denom = denom + exps[h]
    inv = 1.0 / denom                                         # (C, 1)

    # feats_V = sum_h inp_feats[h] * attention[h]   (broadcast over lanes).
    acc = x_ref[0, 0] * (exps[0] * inv)
    for h in range(1, height):
        acc = acc + x_ref[0, h] * (exps[h] * inv)
    o_ref[0] = acc


# ------------------------------------------------------------------ wrapper

def skff_forward(inp_feats, w_du, w_fcs, prelu_a):
    """inp_feats: list/tuple of `height` arrays, each (B, C, H, W) NCHW."""
    height = len(inp_feats)                 # static (pytree structure)
    B, C, H, W = inp_feats[0].shape
    HW = H * W
    d = w_du.shape[0]

    # (B, height, C, HW): pure reshape, HW already the (lane-dense) last axis.
    x = jnp.stack(inp_feats, axis=1).reshape(B, height, C, HW)

    out = pl.pallas_call(
        skff_kernel,
        out_shape=jax.ShapeDtypeStruct((B, C, HW), jnp.float32),
        grid=(B,),
        in_specs=[
            pl.BlockSpec((1, height, C, HW), lambda b: (b, 0, 0, 0)),
            pl.BlockSpec((d, C), lambda b: (0, 0)),
            pl.BlockSpec((height, C, d), lambda b: (0, 0, 0)),
            pl.BlockSpec(memory_space=pltpu.MemorySpace.SMEM),
        ],
        out_specs=pl.BlockSpec((1, C, HW), lambda b: (b, 0, 0)),
        compiler_params=pltpu.CompilerParams(dimension_semantics=("parallel",)),
    )(x, w_du, w_fcs, prelu_a)

    return out.reshape(B, C, H, W)


# ------------------------------------------------------------------ reference (pure JAX)

def reference(inp_feats, w_du, w_fcs, prelu_a):
    x = jnp.stack(inp_feats, axis=1)                       # (B, height, C, H, W)
    U = jnp.sum(x, axis=1)                                 # (B, C, H, W)
    S = jnp.mean(U, axis=(2, 3))                           # (B, C)
    Z = jnp.einsum("bc,dc->bd", S, w_du)                   # conv_du 1x1 (bias=False)
    Z = jnp.where(Z >= 0.0, Z, prelu_a[0] * Z)             # PReLU (single param)
    att = jnp.einsum("bd,hcd->bhc", Z, w_fcs)              # fcs 1x1 (bias=False)
    att = jax.nn.softmax(att, axis=1)                      # softmax over height
    return jnp.sum(x * att[:, :, :, None, None], axis=1)   # (B, C, H, W)


# ------------------------------------------------------------------ main

if __name__ == "__main__":
    # in_channels=32, height=3, reduction=8  ->  d = max(32//8, 4) = 4
    B, C, H, W = 2, 32, 16, 16
    height, reduction = 3, 8
    d = max(C // reduction, 4)

    key = jax.random.PRNGKey(0)
    ks = jax.random.split(key, height + 2)

    inp_feats = [jax.random.normal(ks[i], (B, C, H, W), jnp.float32)
                 for i in range(height)]
    w_du = jax.random.normal(ks[height], (d, C), jnp.float32) * 0.2       # (d, C, 1, 1) in torch
    w_fcs = jax.random.normal(ks[height + 1], (height, C, d), jnp.float32) * 0.2
    prelu_a = jnp.full((1,), 0.25, jnp.float32)                           # nn.PReLU() default

    out = jax.jit(skff_forward)(inp_feats, w_du, w_fcs, prelu_a)
    out = jax.block_until_ready(out)

    ref = reference(inp_feats, w_du, w_fcs, prelu_a)
    assert out.shape == (B, C, H, W)
    max_err = float(jnp.max(jnp.abs(out - ref)))
    assert jnp.allclose(out, ref, atol=1e-4, rtol=1e-4), max_err
    print("KERNEL_OK")
</pallas_src>

<mosaic_0001>
module attributes {stable_mosaic.version = 11 : i64} {
  func.func @skff_kernel(%arg0: i32, %arg1: memref<1x3x32x256xf32, #tpu.memory_space<vmem>>, %arg2: memref<4x32xf32, #tpu.memory_space<vmem>>, %arg3: memref<3x32x4xf32, #tpu.memory_space<vmem>>, %arg4: memref<1xf32, #tpu.memory_space<smem>>, %arg5: memref<1x32x256xf32, #tpu.memory_space<vmem>>) attributes {dimension_semantics = [#tpu.dimension_semantics<parallel>], iteration_bounds = array<i64: 2>, scalar_prefetch = 0 : i64, scratch_operands = 0 : i64, tpu.core_type = #tpu.core_type<tc>, window_params = [{transform_indices = @transform_0, window_bounds = array<i64: 1, 3, 32, 256>}, {pipeline_mode = #tpu.pipeline_mode<synchronous>, transform_indices = @transform_1, window_bounds = array<i64: 4, 32>}, {pipeline_mode = #tpu.pipeline_mode<synchronous>, transform_indices = @transform_2, window_bounds = array<i64: 3, 32, 4>}, {transform_indices = @transform_3, window_bounds = array<i64: 1>}, {transform_indices = @transform_4, window_bounds = array<i64: 1, 32, 256>}]} {
    %c0 = arith.constant 0 : index
    %c0_0 = arith.constant 0 : index
    %c0_1 = arith.constant 0 : index
    %c0_2 = arith.constant 0 : index
    %0 = vector.load %arg1[%c0, %c0_0, %c0_1, %c0_2] : memref<1x3x32x256xf32, #tpu.memory_space<vmem>>, vector<1x1x32x256xf32>
    %1 = vector.shape_cast %0 : vector<1x1x32x256xf32> to vector<32x256xf32>
    %c0_3 = arith.constant 0 : index
    %c1 = arith.constant 1 : index
    %c0_4 = arith.constant 0 : index
    %c0_5 = arith.constant 0 : index
    %2 = vector.load %arg1[%c0_3, %c1, %c0_4, %c0_5] : memref<1x3x32x256xf32, #tpu.memory_space<vmem>>, vector<1x1x32x256xf32>
    %3 = vector.shape_cast %2 : vector<1x1x32x256xf32> to vector<32x256xf32>
    %4 = arith.addf %1, %3 : vector<32x256xf32>
    %c0_6 = arith.constant 0 : index
    %c2 = arith.constant 2 : index
    %c0_7 = arith.constant 0 : index
    %c0_8 = arith.constant 0 : index
    %5 = vector.load %arg1[%c0_6, %c2, %c0_7, %c0_8] : memref<1x3x32x256xf32, #tpu.memory_space<vmem>>, vector<1x1x32x256xf32>
    %6 = vector.shape_cast %5 : vector<1x1x32x256xf32> to vector<32x256xf32>
    %7 = arith.addf %4, %6 : vector<32x256xf32>
    %cst = arith.constant dense<0.000000e+00> : vector<32xf32>
    %8 = vector.multi_reduction <add>, %7, %cst [1] : vector<32x256xf32> to vector<32xf32>
    %9 = vector.shape_cast %8 : vector<32xf32> to vector<32x1xf32>
    %cst_9 = arith.constant 3.906250e-03 : f32
    %10 = vector.broadcast %cst_9 : f32 to vector<32x1xf32>
    %11 = arith.mulf %9, %10 : vector<32x1xf32>
    %c0_10 = arith.constant 0 : index
    %c0_11 = arith.constant 0 : index
    %12 = vector.load %arg2[%c0_10, %c0_11] : memref<4x32xf32, #tpu.memory_space<vmem>>, vector<4x32xf32>
    %cst_12 = arith.constant dense<0.000000e+00> : vector<4x1xf32>
    %13 = tpu.matmul %12, %11, %cst_12 {dimension_numbers = #tpu.dot_dimension_numbers<[1], [0], [0], [1], [0, 0, 1, 1], [], []>} : vector<4x32xf32>, vector<32x1xf32>, vector<4x1xf32> -> vector<4x1xf32>
    %c0_13 = arith.constant 0 : index
    %14 = memref.load %arg4[%c0_13] : memref<1xf32, #tpu.memory_space<smem>>
    %cst_14 = arith.constant 0.000000e+00 : f32
    %15 = vector.broadcast %cst_14 : f32 to vector<4x1xf32>
    %16 = arith.cmpf oge, %13, %15 : vector<4x1xf32>
    %17 = vector.broadcast %14 : f32 to vector<4x1xf32>
    %18 = arith.mulf %17, %13 : vector<4x1xf32>
    %19 = arith.select %16, %13, %18 : vector<4x1xi1>, vector<4x1xf32>
    %c0_15 = arith.constant 0 : index
    %c0_16 = arith.constant 0 : index
    %c0_17 = arith.constant 0 : index
    %20 = vector.load %arg3[%c0_15, %c0_16, %c0_17] : memref<3x32x4xf32, #tpu.memory_space<vmem>>, vector<1x32x4xf32>
    %21 = vector.shape_cast %20 : vector<1x32x4xf32> to vector<32x4xf32>
    %cst_18 = arith.constant dense<0.000000e+00> : vector<32x1xf32>
    %22 = tpu.matmul %21, %19, %cst_18 {dimension_numbers = #tpu.dot_dimension_numbers<[1], [0], [0], [1], [0, 0, 1, 1], [], []>} : vector<32x4xf32>, vector<4x1xf32>, vector<32x1xf32> -> vector<32x1xf32>
    %c1_19 = arith.constant 1 : index
    %c0_20 = arith.constant 0 : index
    %c0_21 = arith.constant 0 : index
    %23 = vector.load %arg3[%c1_19, %c0_20, %c0_21] : memref<3x32x4xf32, #tpu.memory_space<vmem>>, vector<1x32x4xf32>
    %24 = vector.shape_cast %23 : vector<1x32x4xf32> to vector<32x4xf32>
    %cst_22 = arith.constant dense<0.000000e+00> : vector<32x1xf32>
    %25 = tpu.matmul %24, %19, %cst_22 {dimension_numbers = #tpu.dot_dimension_numbers<[1], [0], [0], [1], [0, 0, 1, 1], [], []>} : vector<32x4xf32>, vector<4x1xf32>, vector<32x1xf32> -> vector<32x1xf32>
    %c2_23 = arith.constant 2 : index
    %c0_24 = arith.constant 0 : index
    %c0_25 = arith.constant 0 : index
    %26 = vector.load %arg3[%c2_23, %c0_24, %c0_25] : memref<3x32x4xf32, #tpu.memory_space<vmem>>, vector<1x32x4xf32>
    %27 = vector.shape_cast %26 : vector<1x32x4xf32> to vector<32x4xf32>
    %cst_26 = arith.constant dense<0.000000e+00> : vector<32x1xf32>
    %28 = tpu.matmul %27, %19, %cst_26 {dimension_numbers = #tpu.dot_dimension_numbers<[1], [0], [0], [1], [0, 0, 1, 1], [], []>} : vector<32x4xf32>, vector<4x1xf32>, vector<32x1xf32> -> vector<32x1xf32>
    %29 = arith.maximumf %22, %25 : vector<32x1xf32>
    %30 = arith.maximumf %29, %28 : vector<32x1xf32>
    %31 = arith.subf %22, %30 : vector<32x1xf32>
    %32 = math.exp %31 : vector<32x1xf32>
    %33 = arith.subf %25, %30 : vector<32x1xf32>
    %34 = math.exp %33 : vector<32x1xf32>
    %35 = arith.subf %28, %30 : vector<32x1xf32>
    %36 = math.exp %35 : vector<32x1xf32>
    %37 = arith.addf %32, %34 : vector<32x1xf32>
    %38 = arith.addf %37, %36 : vector<32x1xf32>
    %cst_27 = arith.constant 1.000000e+00 : f32
    %39 = vector.broadcast %cst_27 : f32 to vector<32x1xf32>
    %40 = arith.divf %39, %38 : vector<32x1xf32>
    %c0_28 = arith.constant 0 : index
    %c0_29 = arith.constant 0 : index
    %c0_30 = arith.constant 0 : index
    %c0_31 = arith.constant 0 : index
    %41 = vector.load %arg1[%c0_28, %c0_29, %c0_30, %c0_31] : memref<1x3x32x256xf32, #tpu.memory_space<vmem>>, vector<1x1x32x256xf32>
    %42 = vector.shape_cast %41 : vector<1x1x32x256xf32> to vector<32x256xf32>
    %43 = arith.mulf %32, %40 : vector<32x1xf32>
    %44 = vector.broadcast %43 : vector<32x1xf32> to vector<32x256xf32>
    %45 = arith.mulf %42, %44 : vector<32x256xf32>
    %c0_32 = arith.constant 0 : index
    %c1_33 = arith.constant 1 : index
    %c0_34 = arith.constant 0 : index
    %c0_35 = arith.constant 0 : index
    %46 = vector.load %arg1[%c0_32, %c1_33, %c0_34, %c0_35] : memref<1x3x32x256xf32, #tpu.memory_space<vmem>>, vector<1x1x32x256xf32>
    %47 = vector.shape_cast %46 : vector<1x1x32x256xf32> to vector<32x256xf32>
    %48 = arith.mulf %34, %40 : vector<32x1xf32>
    %49 = vector.broadcast %48 : vector<32x1xf32> to vector<32x256xf32>
    %50 = arith.mulf %47, %49 : vector<32x256xf32>
    %51 = arith.addf %45, %50 : vector<32x256xf32>
    %c0_36 = arith.constant 0 : index
    %c2_37 = arith.constant 2 : index
    %c0_38 = arith.constant 0 : index
    %c0_39 = arith.constant 0 : index
    %52 = vector.load %arg1[%c0_36, %c2_37, %c0_38, %c0_39] : memref<1x3x32x256xf32, #tpu.memory_space<vmem>>, vector<1x1x32x256xf32>
    %53 = vector.shape_cast %52 : vector<1x1x32x256xf32> to vector<32x256xf32>
    %54 = arith.mulf %36, %40 : vector<32x1xf32>
    %55 = vector.broadcast %54 : vector<32x1xf32> to vector<32x256xf32>
    %56 = arith.mulf %53, %55 : vector<32x256xf32>
    %57 = arith.addf %51, %56 : vector<32x256xf32>
    %c0_40 = arith.constant 0 : index
    %c0_41 = arith.constant 0 : index
    %c0_42 = arith.constant 0 : index
    %58 = vector.load %arg5[%c0_40, %c0_41, %c0_42] : memref<1x32x256xf32, #tpu.memory_space<vmem>>, vector<1x32x256xf32>
    %59 = vector.shape_cast %58 : vector<1x32x256xf32> to vector<32x256xf32>
    %60 = vector.shape_cast %57 : vector<32x256xf32> to vector<1x32x256xf32>
    tpu.vector_store %arg5[%c0_40, %c0_41, %c0_42], %60 {strides = array<i32>} : memref<1x32x256xf32, #tpu.memory_space<vmem>>, vector<1x32x256xf32>,
    return
  }
  func.func @transform_0(%arg0: i32) -> (i32, i32, i32, i32) {
    %c0_i32 = arith.constant 0 : i32
    %c0_i32_0 = arith.constant 0 : i32
    %c0_i32_1 = arith.constant 0 : i32
    %c0_i32_2 = arith.constant 0 : i32
    return %arg0, %c0_i32, %c0_i32_0, %c0_i32_1 : i32, i32, i32, i32
  }
  func.func @transform_1(%arg0: i32) -> (i32, i32) {
    %c0_i32 = arith.constant 0 : i32
    %c0_i32_0 = arith.constant 0 : i32
    %c0_i32_1 = arith.constant 0 : i32
    return %c0_i32, %c0_i32_0 : i32, i32
  }
  func.func @transform_2(%arg0: i32) -> (i32, i32, i32) {
    %c0_i32 = arith.constant 0 : i32
    %c0_i32_0 = arith.constant 0 : i32
    %c0_i32_1 = arith.constant 0 : i32
    %c0_i32_2 = arith.constant 0 : i32
    return %c0_i32, %c0_i32_0, %c0_i32_1 : i32, i32, i32
  }
  func.func @transform_3(%arg0: i32) -> i32 {
    %c0_i32 = arith.constant 0 : i32
    %c0_i32_0 = arith.constant 0 : i32
    return %c0_i32 : i32
  }
  func.func @transform_4(%arg0: i32) -> (i32, i32, i32) {
    %c0_i32 = arith.constant 0 : i32
    %c0_i32_0 = arith.constant 0 : i32
    %c0_i32_1 = arith.constant 0 : i32
    return %arg0, %c0_i32, %c0_i32_0 : i32, i32, i32
  }
}

</mosaic_0001>

<llo_original>
// kernel: skff_forward.1
$region0: #{skff_forward.1}
  #allocation0 [shape = 'u32[]', space=smem, size = 0x4, offset = 0x4, fixed_abs, tag = 'smem constant byte address 0x4 - core index']
  #allocation1 [shape = 'u32[144,128]{1,0:T(1,128)}', space=vmem, size = 0x12000, scoped, tag = 'internal scratch']
  #allocation2 [shape = 'f32[1]{0:T(128)S(6)}', space=smem, size = 0x200, scoped, tag = 'scoped memory for skff_forward.1']
  %s0 = inlined_call_operand.vmem [shape: f32[2,3,32,256], index: 0, kind: input, shape index: {}]
  %s1 = inlined_call_operand.vmem [shape: f32[4,32], index: 1, kind: input, shape index: {}]
  %s2 = inlined_call_operand.vmem [shape: f32[3,32,4], index: 2, kind: input, shape index: {}]
  %s3 = inlined_call_operand.<no memory space> [shape: f32[1], index: 3, kind: input, shape index: {}]
  %s4 = inlined_call_operand.vmem [shape: f32[2,32,256], index: 4, kind: output, shape index: {}]
  %s5 = sld [smem:[#allocation0]]
  $region49: #{skff_forward.1} parent=0
    _
  %s7 = ssub.s32 1, %s5
  %s8 = scalar_select 0, %s7, %s5
  %9 = sst [smem:[#allocation2]] %s3
  loop: start=0, step=1, limit=4
  $region2: #{skff_forward.1} parent=0 // loop_pre_header
    _
  $region3: #{skff_forward.1} parent=0 // loop_header
    %s11 = sphi 0, %s15
    %p12 = scmp.ge.s32.totalorder %s11, 4
    %s21 = sphi 0, %s23
    %s24 = sphi 0, %s21
    %s25 = sphi 0, %s24
    %s41 = sphi 0, %s25
    %s45 = sphi 0, %s45
    %s47 = sphi 0, %s45
    %s48 = sphi 0, %s47
    %s62 = sphi 0, %s48
    %s66 = sphi 0, %s66
    %s68 = sphi 0, %s66
    %s69 = sphi 0, %s68
    %s83 = sphi 0, %s69
    %s87 = sphi 0, %s87
    %s89 = sphi 0, %s87
    %s90 = sphi 0, %s89
    %s104 = sphi 0, %s90
    %s110 = sphi 0, %s112
    %s113 = sphi 0, %s110
    %s114 = sphi 0, %s113
    %s130 = sphi 0, %s114
  $region4: #{skff_forward.1} parent=0 // loop_header_branch
    %14 = sbr.rel (%p12) target = $region8
  $region5: #{skff_forward.1} parent=0 // loop_body
    %s16 = ssub.s32 %s11, 1
    %s17 = ssub.s32 %s11, 2
    %s18 = sadd.s32 %s11, 1
    %s19 = ssub.s32 %s11, %s18
    %p20 = scmp.eq.s32.totalorder %s19, 0
    %s22 = sadd.s32 %s21, 1
    %s23 = scalar_select %p20, %s21, %s22
    %p26 = pneg %p20
    %p27 = scmp.eq.s32.totalorder %s11, 1
    %p28 = por %p26, %p27
    %p29 = scmp.ne.s32.totalorder %s21, %s24
    %p30 = scmp.eq.s32.totalorder %s11, 0
    %p31 = por %p29, %p30
    %p32 = scmp.ne.s32.totalorder %s21, %s24
    %p33 = scmp.eq.s32.totalorder %s16, 1
    %p34 = por %p32, %p33
    %p35 = scmp.ne.s32.totalorder %s24, %s25
    %p36 = scmp.eq.s32.totalorder %s16, 0
    %p37 = por %p35, %p36
    %p38 = scmp.ne.s32.totalorder %s24, %s25
    %p39 = scmp.eq.s32.totalorder %s17, 1
    %p40 = por %p38, %p39
    %p42 = scmp.ne.s32.totalorder %s25, %s41
    %p43 = scmp.eq.s32.totalorder %s17, 0
    %p44 = por %p42, %p43
    %s46 = sadd.s32 %s45, 1
    %p49 = scmp.eq.s32.totalorder %s11, 1
    %p50 = scmp.ne.s32.totalorder %s45, %s47
    %p51 = scmp.eq.s32.totalorder %s11, 0
    %p52 = por %p50, %p51
    %p53 = scmp.ne.s32.totalorder %s45, %s47
    %p54 = scmp.eq.s32.totalorder %s16, 1
    %p55 = por %p53, %p54
    %p56 = scmp.ne.s32.totalorder %s47, %s48
    %p57 = scmp.eq.s32.totalorder %s16, 0
    %p58 = por %p56, %p57
    %p59 = scmp.ne.s32.totalorder %s47, %s48
    %p60 = scmp.eq.s32.totalorder %s17, 1
    %p61 = por %p59, %p60
    %p63 = scmp.ne.s32.totalorder %s48, %s62
    %p64 = scmp.eq.s32.totalorder %s17, 0
    %p65 = por %p63, %p64
    %s67 = sadd.s32 %s66, 1
    %p70 = scmp.eq.s32.totalorder %s11, 1
    %p71 = scmp.ne.s32.totalorder %s66, %s68
    %p72 = scmp.eq.s32.totalorder %s11, 0
    %p73 = por %p71, %p72
    %p74 = scmp.ne.s32.totalorder %s66, %s68
    %p75 = scmp.eq.s32.totalorder %s16, 1
    %p76 = por %p74, %p75
    %p77 = scmp.ne.s32.totalorder %s68, %s69
    %p78 = scmp.eq.s32.totalorder %s16, 0
    %p79 = por %p77, %p78
    %p80 = scmp.ne.s32.totalorder %s68, %s69
    %p81 = scmp.eq.s32.totalorder %s17, 1
    %p82 = por %p80, %p81
    %p84 = scmp.ne.s32.totalorder %s69, %s83
    %p85 = scmp.eq.s32.totalorder %s17, 0
    %p86 = por %p84, %p85
    %s88 = sadd.s32 %s87, 1
    %p91 = scmp.eq.s32.totalorder %s11, 1
    %p92 = scmp.ne.s32.totalorder %s87, %s89
    %p93 = scmp.eq.s32.totalorder %s11, 0
    %p94 = por %p92, %p93
    %p95 = scmp.ne.s32.totalorder %s87, %s89
    %p96 = scmp.eq.s32.totalorder %s16, 1
    %p97 = por %p95, %p96
    %p98 = scmp.ne.s32.totalorder %s89, %s90
    %p99 = scmp.eq.s32.totalorder %s16, 0
    %p100 = por %p98, %p99
    %p101 = scmp.ne.s32.totalorder %s89, %s90
    %p102 = scmp.eq.s32.totalorder %s17, 1
    %p103 = por %p101, %p102
    %p105 = scmp.ne.s32.totalorder %s90, %s104
    %p106 = scmp.eq.s32.totalorder %s17, 0
    %p107 = por %p105, %p106
    %s108 = ssub.s32 %s11, %s18
    %p109 = scmp.eq.s32.totalorder %s108, 0
    %s111 = sadd.s32 %s110, 1
    %s112 = scalar_select %p109, %s110, %s111
    %p115 = pneg %p109
    %p116 = scmp.eq.s32.totalorder %s11, 1
    %p117 = por %p115, %p116
    %p118 = scmp.ne.s32.totalorder %s110, %s113
    %p119 = scmp.eq.s32.totalorder %s11, 0
    %p120 = por %p118, %p119
    %p121 = scmp.ne.s32.totalorder %s110, %s113
    %p122 = scmp.eq.s32.totalorder %s16, 1
    %p123 = por %p121, %p122
    %p124 = scmp.ne.s32.totalorder %s113, %s114
    %p125 = scmp.eq.s32.totalorder %s16, 0
    %p126 = por %p124, %p125
    %p127 = scmp.ne.s32.totalorder %s113, %s114
    %p128 = scmp.eq.s32.totalorder %s17, 1
    %p129 = por %p127, %p128
    %p131 = scmp.ne.s32.totalorder %s114, %s130
    %p132 = scmp.eq.s32.totalorder %s17, 0
    %p133 = por %p131, %p132
    %p134 = scmp.le.s32.totalorder 1, %s11
    %p135 = scmp.lt.s32.totalorder %s11, 3
    %p136 = pnand %p134, %p135
    %p137 = pneg %p136
    // Predicated region
    $region9: #{skff_forward.1} parent=5 // pred_check
      _
    $region10: #{skff_forward.1} parent=5 // pred_check_branch
      %139 = sbr.rel (%p136) target = $region12
    $region11: #{skff_forward.1} parent=5 // pred_region
      %s140 = ssub.s32 %s11, 1
      // Predicated region
      $region13: #{skff_forward.1} parent=11 // pred_check
        %p141 = pneg %p58
      $region14: #{skff_forward.1} parent=11 // pred_check_branch
        %143 = sbr.rel (%p141) target = $region16
      $region15: #{skff_forward.1} parent=11 // pred_region
        _
      $region16: #{skff_forward.1} parent=11 // pred_fallthru
        _
      // Predicated region
      $region17: #{skff_forward.1} parent=11 // pred_check
        %p144 = pneg %p79
      $region18: #{skff_forward.1} parent=11 // pred_check_branch
        %146 = sbr.rel (%p144) target = $region20
      $region19: #{skff_forward.1} parent=11 // pred_region
        _
      $region20: #{skff_forward.1} parent=11 // pred_fallthru
        _
      // Predicated region
      $region21: #{skff_forward.1} parent=11 // pred_check
        %p147 = pneg %p100
      $region22: #{skff_forward.1} parent=11 // pred_check_branch
        %149 = sbr.rel (%p147) target = $region24
      $region23: #{skff_forward.1} parent=11 // pred_region
        _
      $region24: #{skff_forward.1} parent=11 // pred_fallthru
        _
    $region12: #{skff_forward.1} parent=5 // pred_fallthru
      _
    %p150 = scmp.lt.s32.totalorder %s11, 2
    // Predicated region
    $region25: #{skff_forward.1} parent=5 // pred_check
      %p151 = pneg %p150
    $region26: #{skff_forward.1} parent=5 // pred_check_branch
      %153 = sbr.rel (%p151) target = $region28
    $region27: #{skff_forward.1} parent=5 // pred_region
      // Predicated region
      $region29: #{skff_forward.1} parent=27 // pred_check
        %p154 = pneg %p31
      $region30: #{skff_forward.1} parent=27 // pred_check_branch
        %156 = sbr.rel (%p154) target = $region32
      $region31: #{skff_forward.1} parent=27 // pred_region
        %p157 = scmp.lt.s32.totalorder %s11, 1
        %s158 = scalar_select %p157, %s11, 1
        %s159 = smul.addr %s158, 24
        %s160 = smul.addr %s159, 8
        %s161 = scalar_lea.vmem %s0, %s160
      $region32: #{skff_forward.1} parent=27 // pred_fallthru
        _
    $region28: #{skff_forward.1} parent=5 // pred_fallthru
      _
    %p162 = scmp.le.s32.totalorder 1, %s11
    %p163 = scmp.lt.s32.totalorder %s11, 3
    %p164 = pnand %p162, %p163
    %p165 = pneg %p164
    // Predicated region
    $region33: #{skff_forward.1} parent=5 // pred_check
      _
    $region34: #{skff_forward.1} parent=5 // pred_check_branch
      %167 = sbr.rel (%p164) target = $region36
    $region35: #{skff_forward.1} parent=5 // pred_region
      %s168 = ssub.s32 %s11, 1
      %p169 = scmp.lt.s32.totalorder %s16, 1
      %s170 = scalar_select %p169, %s16, 1
      %s171 = smul.addr %s170, 24
      %s172 = smul.addr %s171, 8
      %s173 = scalar_lea.vmem %s0, %s172
      %p174 = pneg %p37
      %p175 = pneg %p34
      %p176 = pneg %p58
      %p177 = pneg %p55
      %p178 = pneg %p79
      %p179 = pneg %p76
      %p180 = pneg %p100
      %p181 = pneg %p97
      %p182 = pneg %p126
      %p183 = pneg %p123
      %p184 = scmp.lt.s32.totalorder %s16, 1
      %s185 = scalar_select %p184, %s16, 1
      %s186 = smul.addr %s185, 8
      %s187 = smul.addr %s186, 8
      %s188 = scalar_lea.vmem %s4, %s187
      %p189 = scmp.lt.s32.totalorder %s16, 1
      %s190 = scalar_select %p189, %s16, 1
      %s191 = smul.addr %s190, 24
      %s192 = smul.addr %s191, 8
      %s193 = scalar_lea.vmem %s0, %s192
      %p194 = scmp.lt.s32.totalorder %s16, 1
      %s195 = scalar_select %p194, %s16, 1
      %s196 = smul.addr %s195, 8
      %s197 = smul.addr %s196, 8
      %s198 = scalar_lea.vmem %s4, %s197
      %v199 = vld [vmem:[%s193] sm:$0xff]
      %v200 = vld [vmem:[%s193 + $0x8] sm:$0xff]
      %v201 = vld [vmem:[%s193 + $0x10] sm:$0xff]
      %v202 = vld [vmem:[%s193 + $0x18] sm:$0xff]
      %v203 = vld [vmem:[%s193 + $0x20] sm:$0xff]
      %v204 = vld [vmem:[%s193 + $0x28] sm:$0xff]
      %v205 = vld [vmem:[%s193 + $0x30] sm:$0xff]
      %v206 = vld [vmem:[%s193 + $0x38] sm:$0xff]
      %s207 = scalar_lea.vmem %s193, 64
      %v208 = vld [vmem:[%s207] sm:$0xff]
      %v209 = vld [vmem:[%s207 + $0x8] sm:$0xff]
      %v210 = vld [vmem:[%s207 + $0x10] sm:$0xff]
      %v211 = vld [vmem:[%s207 + $0x18] sm:$0xff]
      %v212 = vld [vmem:[%s207 + $0x20] sm:$0xff]
      %v213 = vld [vmem:[%s207 + $0x28] sm:$0xff]
      %v214 = vld [vmem:[%s207 + $0x30] sm:$0xff]
      %v215 = vld [vmem:[%s207 + $0x38] sm:$0xff]
      %v216 = vadd.f32 %v199, %v208
      %v217 = vadd.f32 %v200, %v209
      %v218 = vadd.f32 %v201, %v210
      %v219 = vadd.f32 %v202, %v211
      %v220 = vadd.f32 %v203, %v212
      %v221 = vadd.f32 %v204, %v213
      %v222 = vadd.f32 %v205, %v214
      %v223 = vadd.f32 %v206, %v215
      %s224 = scalar_lea.vmem %s193, 128
      %v225 = vld [vmem:[%s224] sm:$0xff]
      %v226 = vld [vmem:[%s224 + $0x8] sm:$0xff]
      %v227 = vld [vmem:[%s224 + $0x10] sm:$0xff]
      %v228 = vld [vmem:[%s224 + $0x18] sm:$0xff]
      %v229 = vld [vmem:[%s224 + $0x20] sm:$0xff]
      %v230 = vld [vmem:[%s224 + $0x28] sm:$0xff]
      %v231 = vld [vmem:[%s224 + $0x30] sm:$0xff]
      %v232 = vld [vmem:[%s224 + $0x38] sm:$0xff]
      %v233 = vadd.f32 %v216, %v225
      %v234 = vadd.f32 %v217, %v226
      %v235 = vadd.f32 %v218, %v227
      %v236 = vadd.f32 %v219, %v228
      %v237 = vadd.f32 %v220, %v229
      %v238 = vadd.f32 %v221, %v230
      %v239 = vadd.f32 %v222, %v231
      %v240 = vadd.f32 %v223, %v232
      %v241 = vadd.f32 %v233, %v234
      %242 = vadd.xlane.f32.xlu0 %v241
      %v243 = vpop.xlane.xlu0 %242
      %v244 = vadd.f32 %v235, %v236
      %245 = vadd.xlane.f32.xlu0 %v244
      %v246 = vpop.xlane.xlu0 %245
      %v247 = vadd.f32 %v237, %v238
      %248 = vadd.xlane.f32.xlu0 %v247
      %v249 = vpop.xlane.xlu0 %248
      %v250 = vadd.f32 %v239, %v240
      %251 = vadd.xlane.f32.xlu0 %v250
      %v252 = vpop.xlane.xlu0 %251
      %v253 = vmul.f32 %v243, 0.00390625
      %v254 = vmul.f32 %v246, 0.00390625
      %v255 = vmul.f32 %v249, 0.00390625
      %v256 = vmul.f32 %v252, 0.00390625
      %v257 = vld [vmem:[%s1] sm:$0xf]
      %vm258 = vcmask 261120
      %v260 = vsel %vm258, %v257, 0
      %262 = vmatprep.subr.mxu0 0.0
      %263 = vmatpush1.msra.mxu0 %v253
      %264 = vmatprep.subr.mxu0 0.0
      %265 = vmatpush1.msra.mxu0 %v254
      %266 = vmatprep.subr.mxu0 0.0
      %267 = vmatpush1.msra.mxu0 %v255
      %268 = vmatprep.subr.mxu0 0.0
      %269 = vmatpush1.msra.mxu0 %v256
      %270 = vmatprep.subr.mxu0 0.0
      %271 = vmatpush1.msra.mxu0 0.0
      %272 = vmatprep.subr.mxu0 0.0
      %273 = vmatpush1.msra.mxu0 0.0
      %274 = vmatprep.subr.mxu0 0.0
      %275 = vmatpush1.msra.mxu0 0.0
      %276 = vmatprep.subr.mxu0 0.0
      %277 = vmatpush1.msra.mxu0 0.0
      %278 = vmatprep.subr.mxu0 0.0
      %279 = vmatpush1.msra.mxu0 0.0
      %280 = vmatprep.subr.mxu0 0.0
      %281 = vmatpush1.msra.mxu0 0.0
      %282 = vmatprep.subr.mxu0 0.0
      %283 = vmatpush1.msra.mxu0 0.0
      %284 = vmatprep.subr.mxu0 0.0
      %285 = vmatpush1.msra.mxu0 0.0
      %286 = vmatprep.subr.mxu0 0.0
      %287 = vmatpush1.msra.mxu0 0.0
      %288 = vmatprep.subr.mxu0 0.0
      %289 = vmatpush1.msra.mxu0 0.0
      %290 = vmatprep.subr.mxu0 0.0
      %291 = vmatpush1.msra.mxu0 0.0
      %292 = vmatprep.subr.mxu0 0.0
      %293 = vmatpush1.msra.mxu0 0.0
      %294 = vmatprep.subr.mxu0 0.0
      %295 = vmatpush1.msra.mxu0 0.0
      %296 = vmatprep.subr.mxu0 0.0
      %297 = vmatpush1.msra.mxu0 0.0
      %298 = vmatprep.subr.mxu0 0.0
      %299 = vmatpush1.msra.mxu0 0.0
      %300 = vmatprep.subr.mxu0 0.0
      %301 = vmatpush1.msra.mxu0 0.0
      %302 = vmatprep.subr.mxu0 0.0
      %303 = vmatpush1.msra.mxu0 0.0
      %304 = vmatprep.subr.mxu0 0.0
      %305 = vmatpush1.msra.mxu0 0.0
      %306 = vmatprep.subr.mxu0 0.0
      %307 = vmatpush1.msra.mxu0 0.0
      %308 = vmatprep.subr.mxu0 0.0
      %309 = vmatpush1.msra.mxu0 0.0
      %310 = vmatprep.subr.mxu0 0.0
      %311 = vmatpush1.msra.mxu0 0.0
      %312 = vmatprep.subr.mxu0 0.0
      %313 = vmatpush1.msra.mxu0 0.0
      %314 = vmatprep.subr.mxu0 0.0
      %315 = vmatpush1.msra.mxu0 0.0
      %316 = vmatprep.subr.mxu0 0.0
      %317 = vmatpush1.msra.mxu0 0.0
      %318 = vmatprep.subr.mxu0 0.0
      %319 = vmatpush1.msra.mxu0 0.0
      %320 = vmatprep.subr.mxu0 0.0
      %321 = vmatpush1.msra.mxu0 0.0
      %322 = vmatprep.subr.mxu0 0.0
      %323 = vmatpush1.msra.mxu0 0.0
      %324 = vmatprep.subr.mxu0 0.0
      %325 = vmatpush1.msra.mxu0 0.0
      %326 = vmatprep.mubr.f32.mxu0 0.0
      %327 = vmatmul.mubr.f32.gmra.mrb[0].mxu0 %v260
      %v328 = vpop.f32.mrb[0].mxu0
      %v329 = vadd.f32 0.0, %v328
      %v330 = vpop.f32.mrb[0].mxu0
      %331 = vdwg.mxu0
      %s332 = sld [smem:[#allocation2]]
      %vm333 = vcmp.ge.f32.partialorder %v329, 0.0
      %v334 = vstv %s332
      %v335 = vmul.f32 %v334, %v329
      %v336 = vsel %vm333, %v329, %v335
      %v337 = vld [vmem:[%s2] sm:$0xff]
      %v338 = vld [vmem:[%s2 + $0x8] sm:$0xff]
      %v339 = vld [vmem:[%s2 + $0x10] sm:$0xff]
      %v340 = vld [vmem:[%s2 + $0x18] sm:$0xff]
      %vm341 = vcmask 31744
      %v343 = vsel %vm341, %v337, 0
      %v346 = vsel %vm341, %v338, 0
      %v349 = vsel %vm341, %v339, 0
      %v352 = vsel %vm341, %v340, 0
      %vm354 = vcmask 1043456
      %v356 = vsel %vm354, %v336, 0
      %358 = vmatprep.subr.mxu0 0.0
      %359 = vmatpush1.msra.mxu0 %v356
      %360 = vmatprep.subr.mxu0 0.0
      %361 = vmatpush1.msra.mxu0 0.0
      %362 = vmatprep.subr.mxu0 0.0
      %363 = vmatpush1.msra.mxu0 0.0
      %364 = vmatprep.subr.mxu0 0.0
      %365 = vmatpush1.msra.mxu0 0.0
      %366 = vmatprep.subr.mxu0 0.0
      %367 = vmatpush1.msra.mxu0 0.0
      %368 = vmatprep.subr.mxu0 0.0
      %369 = vmatpush1.msra.mxu0 0.0
      %370 = vmatprep.subr.mxu0 0.0
      %371 = vmatpush1.msra.mxu0 0.0
      %372 = vmatprep.subr.mxu0 0.0
      %373 = vmatpush1.msra.mxu0 0.0
      %374 = vmatprep.subr.mxu0 0.0
      %375 = vmatpush1.msra.mxu0 0.0
      %376 = vmatprep.subr.mxu0 0.0
      %377 = vmatpush1.msra.mxu0 0.0
      %378 = vmatprep.subr.mxu0 0.0
      %379 = vmatpush1.msra.mxu0 0.0
      %380 = vmatprep.subr.mxu0 0.0
      %381 = vmatpush1.msra.mxu0 0.0
      %382 = vmatprep.subr.mxu0 0.0
      %383 = vmatpush1.msra.mxu0 0.0
      %384 = vmatprep.subr.mxu0 0.0
      %385 = vmatpush1.msra.mxu0 0.0
      %386 = vmatprep.subr.mxu0 0.0
      %387 = vmatpush1.msra.mxu0 0.0
      %388 = vmatprep.subr.mxu0 0.0
      %389 = vmatpush1.msra.mxu0 0.0
      %390 = vmatprep.subr.mxu0 0.0
      %391 = vmatpush1.msra.mxu0 0.0
      %392 = vmatprep.subr.mxu0 0.0
      %393 = vmatpush1.msra.mxu0 0.0
      %394 = vmatprep.subr.mxu0 0.0
      %395 = vmatpush1.msra.mxu0 0.0
      %396 = vmatprep.subr.mxu0 0.0
      %397 = vmatpush1.msra.mxu0 0.0
      %398 = vmatprep.subr.mxu0 0.0
      %399 = vmatpush1.msra.mxu0 0.0
      %400 = vmatprep.subr.mxu0 0.0
      %401 = vmatpush1.msra.mxu0 0.0
      %402 = vmatprep.subr.mxu0 0.0
      %403 = vmatpush1.msra.mxu0 0.0
      %404 = vmatprep.subr.mxu0 0.0
      %405 = vmatpush1.msra.mxu0 0.0
      %406 = vmatprep.subr.mxu0 0.0
      %407 = vmatpush1.msra.mxu0 0.0
      %408 = vmatprep.subr.mxu0 0.0
      %409 = vmatpush1.msra.mxu0 0.0
      %410 = vmatprep.subr.mxu0 0.0
      %411 = vmatpush1.msra.mxu0 0.0
      %412 = vmatprep.subr.mxu0 0.0
      %413 = vmatpush1.msra.mxu0 0.0
      %414 = vmatprep.subr.mxu0 0.0
      %415 = vmatpush1.msra.mxu0 0.0
      %416 = vmatprep.subr.mxu0 0.0
      %417 = vmatpush1.msra.mxu0 0.0
      %418 = vmatprep.subr.mxu0 0.0
      %419 = vmatpush1.msra.mxu0 0.0
      %420 = vmatprep.subr.mxu0 0.0
      %421 = vmatpush1.msra.mxu0 0.0
      %422 = vmatprep.mubr.f32.mxu0 0.0
      %423 = vmatmul.mubr.f32.gmra.mrb[0].mxu0 %v343
      %v424 = vpop.f32.mrb[0].mxu0
      %v425 = vadd.f32 0.0, %v424
      %v426 = vpop.f32.mrb[0].mxu0
      %427 = vmatprep.mubr.f32.mxu0 0.0
      %428 = vmatmul.mubr.f32.gmra.mrb[0].mxu0 %v346
      %v429 = vpop.f32.mrb[0].mxu0
      %v430 = vadd.f32 0.0, %v429
      %v431 = vpop.f32.mrb[0].mxu0
      %432 = vmatprep.mubr.f32.mxu0 0.0
      %433 = vmatmul.mubr.f32.gmra.mrb[0].mxu0 %v349
      %v434 = vpop.f32.mrb[0].mxu0
      %v435 = vadd.f32 0.0, %v434
      %v436 = vpop.f32.mrb[0].mxu0
      %437 = vmatprep.mubr.f32.mxu0 0.0
      %438 = vmatmul.mubr.f32.gmra.mrb[0].mxu0 %v352
      %v439 = vpop.f32.mrb[0].mxu0
      %v440 = vadd.f32 0.0, %v439
      %v441 = vpop.f32.mrb[0].mxu0
      %442 = vdwg.mxu0
      %s443 = scalar_lea.vmem %s2, 32
      %v444 = vld [vmem:[%s443] sm:$0xff]
      %v445 = vld [vmem:[%s443 + $0x8] sm:$0xff]
      %v446 = vld [vmem:[%s443 + $0x10] sm:$0xff]
      %v447 = vld [vmem:[%s443 + $0x18] sm:$0xff]
      %v449 = vsel %vm341, %v444, 0
      %v452 = vsel %vm341, %v445, 0
      %v455 = vsel %vm341, %v446, 0
      %v458 = vsel %vm341, %v447, 0
      %460 = vmatprep.subr.mxu0 0.0
      %461 = vmatpush1.msra.mxu0 %v356
      %462 = vmatprep.subr.mxu0 0.0
      %463 = vmatpush1.msra.mxu0 0.0
      %464 = vmatprep.subr.mxu0 0.0
      %465 = vmatpush1.msra.mxu0 0.0
      %466 = vmatprep.subr.mxu0 0.0
      %467 = vmatpush1.msra.mxu0 0.0
      %468 = vmatprep.subr.mxu0 0.0
      %469 = vmatpush1.msra.mxu0 0.0
      %470 = vmatprep.subr.mxu0 0.0
      %471 = vmatpush1.msra.mxu0 0.0
      %472 = vmatprep.subr.mxu0 0.0
      %473 = vmatpush1.msra.mxu0 0.0
      %474 = vmatprep.subr.mxu0 0.0
      %475 = vmatpush1.msra.mxu0 0.0
      %476 = vmatprep.subr.mxu0 0.0
      %477 = vmatpush1.msra.mxu0 0.0
      %478 = vmatprep.subr.mxu0 0.0
      %479 = vmatpush1.msra.mxu0 0.0
      %480 = vmatprep.subr.mxu0 0.0
      %481 = vmatpush1.msra.mxu0 0.0
      %482 = vmatprep.subr.mxu0 0.0
      %483 = vmatpush1.msra.mxu0 0.0
      %484 = vmatprep.subr.mxu0 0.0
      %485 = vmatpush1.msra.mxu0 0.0
      %486 = vmatprep.subr.mxu0 0.0
      %487 = vmatpush1.msra.mxu0 0.0
      %488 = vmatprep.subr.mxu0 0.0
      %489 = vmatpush1.msra.mxu0 0.0
      %490 = vmatprep.subr.mxu0 0.0
      %491 = vmatpush1.msra.mxu0 0.0
      %492 = vmatprep.subr.mxu0 0.0
      %493 = vmatpush1.msra.mxu0 0.0
      %494 = vmatprep.subr.mxu0 0.0
      %495 = vmatpush1.msra.mxu0 0.0
      %496 = vmatprep.subr.mxu0 0.0
      %497 = vmatpush1.msra.mxu0 0.0
      %498 = vmatprep.subr.mxu0 0.0
      %499 = vmatpush1.msra.mxu0 0.0
      %500 = vmatprep.subr.mxu0 0.0
      %501 = vmatpush1.msra.mxu0 0.0
      %502 = vmatprep.subr.mxu0 0.0
      %503 = vmatpush1.msra.mxu0 0.0
      %504 = vmatprep.subr.mxu0 0.0
      %505 = vmatpush1.msra.mxu0 0.0
      %506 = vmatprep.subr.mxu0 0.0
      %507 = vmatpush1.msra.mxu0 0.0
      %508 = vmatprep.subr.mxu0 0.0
      %509 = vmatpush1.msra.mxu0 0.0
      %510 = vmatprep.subr.mxu0 0.0
      %511 = vmatpush1.msra.mxu0 0.0
      %512 = vmatprep.subr.mxu0 0.0
      %513 = vmatpush1.msra.mxu0 0.0
      %514 = vmatprep.subr.mxu0 0.0
      %515 = vmatpush1.msra.mxu0 0.0
      %516 = vmatprep.subr.mxu0 0.0
      %517 = vmatpush1.msra.mxu0 0.0
      %518 = vmatprep.subr.mxu0 0.0
      %519 = vmatpush1.msra.mxu0 0.0
      %520 = vmatprep.subr.mxu0 0.0
      %521 = vmatpush1.msra.mxu0 0.0
      %522 = vmatprep.subr.mxu0 0.0
      %523 = vmatpush1.msra.mxu0 0.0
      %524 = vmatprep.mubr.f32.mxu0 0.0
      %525 = vmatmul.mubr.f32.gmra.mrb[0].mxu0 %v449
      %v526 = vpop.f32.mrb[0].mxu0
      %v527 = vadd.f32 0.0, %v526
      %v528 = vpop.f32.mrb[0].mxu0
      %529 = vmatprep.mubr.f32.mxu0 0.0
      %530 = vmatmul.mubr.f32.gmra.mrb[0].mxu0 %v452
      %v531 = vpop.f32.mrb[0].mxu0
      %v532 = vadd.f32 0.0, %v531
      %v533 = vpop.f32.mrb[0].mxu0
      %534 = vmatprep.mubr.f32.mxu0 0.0
      %535 = vmatmul.mubr.f32.gmra.mrb[0].mxu0 %v455
      %v536 = vpop.f32.mrb[0].mxu0
      %v537 = vadd.f32 0.0, %v536
      %v538 = vpop.f32.mrb[0].mxu0
      %539 = vmatprep.mubr.f32.mxu0 0.0
      %540 = vmatmul.mubr.f32.gmra.mrb[0].mxu0 %v458
      %v541 = vpop.f32.mrb[0].mxu0
      %v542 = vadd.f32 0.0, %v541
      %v543 = vpop.f32.mrb[0].mxu0
      %544 = vdwg.mxu0
      %s545 = scalar_lea.vmem %s2, 64
      %v546 = vld [vmem:[%s545] sm:$0xff]
      %v547 = vld [vmem:[%s545 + $0x8] sm:$0xff]
      %v548 = vld [vmem:[%s545 + $0x10] sm:$0xff]
      %v549 = vld [vmem:[%s545 + $0x18] sm:$0xff]
      %v551 = vsel %vm341, %v546, 0
      %v554 = vsel %vm341, %v547, 0
      %v557 = vsel %vm341, %v548, 0
      %v560 = vsel %vm341, %v549, 0
      %562 = vmatprep.subr.mxu0 0.0
      %563 = vmatpush1.msra.mxu0 %v356
      %564 = vmatprep.subr.mxu0 0.0
      %565 = vmatpush1.msra.mxu0 0.0
      %566 = vmatprep.subr.mxu0 0.0
      %567 = vmatpush1.msra.mxu0 0.0
      %568 = vmatprep.subr.mxu0 0.0
      %569 = vmatpush1.msra.mxu0 0.0
      %570 = vmatprep.subr.mxu0 0.0
      %571 = vmatpush1.msra.mxu0 0.0
      %572 = vmatprep.subr.mxu0 0.0
      %573 = vmatpush1.msra.mxu0 0.0
      %574 = vmatprep.subr.mxu0 0.0
      %575 = vmatpush1.msra.mxu0 0.0
      %576 = vmatprep.subr.mxu0 0.0
      %577 = vmatpush1.msra.mxu0 0.0
      %578 = vmatprep.subr.mxu0 0.0
      %579 = vmatpush1.msra.mxu0 0.0
      %580 = vmatprep.subr.mxu0 0.0
      %581 = vmatpush1.msra.mxu0 0.0
      %582 = vmatprep.subr.mxu0 0.0
      %583 = vmatpush1.msra.mxu0 0.0
      %584 = vmatprep.subr.mxu0 0.0
      %585 = vmatpush1.msra.mxu0 0.0
      %586 = vmatprep.subr.mxu0 0.0
      %587 = vmatpush1.msra.mxu0 0.0
      %588 = vmatprep.subr.mxu0 0.0
      %589 = vmatpush1.msra.mxu0 0.0
      %590 = vmatprep.subr.mxu0 0.0
      %591 = vmatpush1.msra.mxu0 0.0
      %592 = vmatprep.subr.mxu0 0.0
      %593 = vmatpush1.msra.mxu0 0.0
      %594 = vmatprep.subr.mxu0 0.0
      %595 = vmatpush1.msra.mxu0 0.0
      %596 = vmatprep.subr.mxu0 0.0
      %597 = vmatpush1.msra.mxu0 0.0
      %598 = vmatprep.subr.mxu0 0.0
      %599 = vmatpush1.msra.mxu0 0.0
      %600 = vmatprep.subr.mxu0 0.0
      %601 = vmatpush1.msra.mxu0 0.0
      %602 = vmatprep.subr.mxu0 0.0
      %603 = vmatpush1.msra.mxu0 0.0
      %604 = vmatprep.subr.mxu0 0.0
      %605 = vmatpush1.msra.mxu0 0.0
      %606 = vmatprep.subr.mxu0 0.0
      %607 = vmatpush1.msra.mxu0 0.0
      %608 = vmatprep.subr.mxu0 0.0
      %609 = vmatpush1.msra.mxu0 0.0
      %610 = vmatprep.subr.mxu0 0.0
      %611 = vmatpush1.msra.mxu0 0.0
      %612 = vmatprep.subr.mxu0 0.0
      %613 = vmatpush1.msra.mxu0 0.0
      %614 = vmatprep.subr.mxu0 0.0
      %615 = vmatpush1.msra.mxu0 0.0
      %616 = vmatprep.subr.mxu0 0.0
      %617 = vmatpush1.msra.mxu0 0.0
      %618 = vmatprep.subr.mxu0 0.0
      %619 = vmatpush1.msra.mxu0 0.0
      %620 = vmatprep.subr.mxu0 0.0
      %621 = vmatpush1.msra.mxu0 0.0
      %622 = vmatprep.subr.mxu0 0.0
      %623 = vmatpush1.msra.mxu0 0.0
      %624 = vmatprep.subr.mxu0 0.0
      %625 = vmatpush1.msra.mxu0 0.0
      %626 = vmatprep.mubr.f32.mxu0 0.0
      %627 = vmatmul.mubr.f32.gmra.mrb[0].mxu0 %v551
      %v628 = vpop.f32.mrb[0].mxu0
      %v629 = vadd.f32 0.0, %v628
      %v630 = vpop.f32.mrb[0].mxu0
      %631 = vmatprep.mubr.f32.mxu0 0.0
      %632 = vmatmul.mubr.f32.gmra.mrb[0].mxu0 %v554
      %v633 = vpop.f32.mrb[0].mxu0
      %v634 = vadd.f32 0.0, %v633
      %v635 = vpop.f32.mrb[0].mxu0
      %636 = vmatprep.mubr.f32.mxu0 0.0
      %637 = vmatmul.mubr.f32.gmra.mrb[0].mxu0 %v557
      %v638 = vpop.f32.mrb[0].mxu0
      %v639 = vadd.f32 0.0, %v638
      %v640 = vpop.f32.mrb[0].mxu0
      %641 = vmatprep.mubr.f32.mxu0 0.0
      %642 = vmatmul.mubr.f32.gmra.mrb[0].mxu0 %v560
      %v643 = vpop.f32.mrb[0].mxu0
      %v644 = vadd.f32 0.0, %v643
      %v645 = vpop.f32.mrb[0].mxu0
      %646 = vdwg.mxu0
      %v647 = vmax.f32 %v425, %v527
      %v648 = vmax.f32 %v430, %v532
      %v649 = vmax.f32 %v435, %v537
      %v650 = vmax.f32 %v440, %v542
      %v651 = vmax.f32 %v647, %v629
      %v652 = vmax.f32 %v648, %v634
      %v653 = vmax.f32 %v649, %v639
      %v654 = vmax.f32 %v650, %v644
      %v655 = vsub.f32 %v425, %v651
      %v656 = vsub.f32 %v430, %v652
      %v657 = vsub.f32 %v435, %v653
      %v658 = vsub.f32 %v440, %v654
      %v659 = vmul.f32 %v655, 1.442695
      %v660 = vpow.pop %v659
      %v661 = vmul.f32 %v656, 1.442695
      %v662 = vpow.pop %v661
      %v663 = vmul.f32 %v657, 1.442695
      %v664 = vpow.pop %v663
      %v665 = vmul.f32 %v658, 1.442695
      %v666 = vpow.pop %v665
      %v667 = vsub.f32 %v527, %v651
      %v668 = vsub.f32 %v532, %v652
      %v669 = vsub.f32 %v537, %v653
      %v670 = vsub.f32 %v542, %v654
      %v671 = vmul.f32 %v667, 1.442695
      %v672 = vpow.pop %v671
      %v673 = vmul.f32 %v668, 1.442695
      %v674 = vpow.pop %v673
      %v675 = vmul.f32 %v669, 1.442695
      %v676 = vpow.pop %v675
      %v677 = vmul.f32 %v670, 1.442695
      %v678 = vpow.pop %v677
      %v679 = vsub.f32 %v629, %v651
      %v680 = vsub.f32 %v634, %v652
      %v681 = vsub.f32 %v639, %v653
      %v682 = vsub.f32 %v644, %v654
      %v683 = vmul.f32 %v679, 1.442695
      %v684 = vpow.pop %v683
      %v685 = vmul.f32 %v680, 1.442695
      %v686 = vpow.pop %v685
      %v687 = vmul.f32 %v681, 1.442695
      %v688 = vpow.pop %v687
      %v689 = vmul.f32 %v682, 1.442695
      %v690 = vpow.pop %v689
      %v691 = vadd.f32 %v660, %v672
      %v692 = vadd.f32 %v662, %v674
      %v693 = vadd.f32 %v664, %v676
      %v694 = vadd.f32 %v666, %v678
      %v695 = vadd.f32 %v691, %v684
      %v696 = vadd.f32 %v692, %v686
      %v697 = vadd.f32 %v693, %v688
      %v698 = vadd.f32 %v694, %v690
      %v699 = vrcp.pop %v695
      %v700 = vmul.f32 1.0, %v699
      %v701 = vrcp.pop %v696
      %v702 = vmul.f32 1.0, %v701
      %v703 = vrcp.pop %v697
      %v704 = vmul.f32 1.0, %v703
      %v705 = vrcp.pop %v698
      %v706 = vmul.f32 1.0, %v705
      %v707 = vmul.f32 %v660, %v700
      %v708 = vmul.f32 %v662, %v702
      %v709 = vmul.f32 %v664, %v704
      %v710 = vmul.f32 %v666, %v706
      %712 = vset.pattern.permute.xlu0 0
      %713 = vperm.xlu0 %712, %v707
      %v714 = vpop.permute.xlu0 %713
      %717 = vset.pattern.permute.xlu0 0
      %718 = vperm.xlu0 %717, %v708
      %v719 = vpop.permute.xlu0 %718
      %722 = vset.pattern.permute.xlu0 0
      %723 = vperm.xlu0 %722, %v709
      %v724 = vpop.permute.xlu0 %723
      %727 = vset.pattern.permute.xlu0 0
      %728 = vperm.xlu0 %727, %v710
      %v729 = vpop.permute.xlu0 %728
      %v731 = vmul.f32 %v199, %v714
      %v732 = vmul.f32 %v200, %v714
      %v733 = vmul.f32 %v201, %v719
      %v734 = vmul.f32 %v202, %v719
      %v735 = vmul.f32 %v203, %v724
      %v736 = vmul.f32 %v204, %v724
      %v737 = vmul.f32 %v205, %v729
      %v738 = vmul.f32 %v206, %v729
      %v739 = vmul.f32 %v672, %v700
      %v740 = vmul.f32 %v674, %v702
      %v741 = vmul.f32 %v676, %v704
      %v742 = vmul.f32 %v678, %v706
      %744 = vset.pattern.permute.xlu0 0
      %745 = vperm.xlu0 %744, %v739
      %v746 = vpop.permute.xlu0 %745
      %749 = vset.pattern.permute.xlu0 0
      %750 = vperm.xlu0 %749, %v740
      %v751 = vpop.permute.xlu0 %750
      %754 = vset.pattern.permute.xlu0 0
      %755 = vperm.xlu0 %754, %v741
      %v756 = vpop.permute.xlu0 %755
      %759 = vset.pattern.permute.xlu0 0
      %760 = vperm.xlu0 %759, %v742
      %v761 = vpop.permute.xlu0 %760
      %v763 = vmul.f32 %v208, %v746
      %v764 = vmul.f32 %v209, %v746
      %v765 = vmul.f32 %v210, %v751
      %v766 = vmul.f32 %v211, %v751
      %v767 = vmul.f32 %v212, %v756
      %v768 = vmul.f32 %v213, %v756
      %v769 = vmul.f32 %v214, %v761
      %v770 = vmul.f32 %v215, %v761
      %v771 = vadd.f32 %v731, %v763
      %v772 = vadd.f32 %v732, %v764
      %v773 = vadd.f32 %v733, %v765
      %v774 = vadd.f32 %v734, %v766
      %v775 = vadd.f32 %v735, %v767
      %v776 = vadd.f32 %v736, %v768
      %v777 = vadd.f32 %v737, %v769
      %v778 = vadd.f32 %v738, %v770
      %v779 = vmul.f32 %v684, %v700
      %v780 = vmul.f32 %v686, %v702
      %v781 = vmul.f32 %v688, %v704
      %v782 = vmul.f32 %v690, %v706
      %784 = vset.pattern.permute.xlu0 0
      %785 = vperm.xlu0 %784, %v779
      %v786 = vpop.permute.xlu0 %785
      %789 = vset.pattern.permute.xlu0 0
      %790 = vperm.xlu0 %789, %v780
      %v791 = vpop.permute.xlu0 %790
      %794 = vset.pattern.permute.xlu0 0
      %795 = vperm.xlu0 %794, %v781
      %v796 = vpop.permute.xlu0 %795
      %799 = vset.pattern.permute.xlu0 0
      %800 = vperm.xlu0 %799, %v782
      %v801 = vpop.permute.xlu0 %800
      %v803 = vmul.f32 %v225, %v786
      %v804 = vmul.f32 %v226, %v786
      %v805 = vmul.f32 %v227, %v791
      %v806 = vmul.f32 %v228, %v791
      %v807 = vmul.f32 %v229, %v796
      %v808 = vmul.f32 %v230, %v796
      %v809 = vmul.f32 %v231, %v801
      %v810 = vmul.f32 %v232, %v801
      %v811 = vadd.f32 %v771, %v803
      %v812 = vadd.f32 %v772, %v804
      %v813 = vadd.f32 %v773, %v805
      %v814 = vadd.f32 %v774, %v806
      %v815 = vadd.f32 %v775, %v807
      %v816 = vadd.f32 %v776, %v808
      %v817 = vadd.f32 %v777, %v809
      %v818 = vadd.f32 %v778, %v810
      %819 = vst [vmem:[%s198] sm:$0xff] %v811
      %820 = vst [vmem:[%s198 + $0x8] sm:$0xff] %v812
      %821 = vst [vmem:[%s198 + $0x10] sm:$0xff] %v813
      %822 = vst [vmem:[%s198 + $0x18] sm:$0xff] %v814
      %823 = vst [vmem:[%s198 + $0x20] sm:$0xff] %v815
      %824 = vst [vmem:[%s198 + $0x28] sm:$0xff] %v816
      %825 = vst [vmem:[%s198 + $0x30] sm:$0xff] %v817
      %826 = vst [vmem:[%s198 + $0x38] sm:$0xff] %v818
      %p827 = scmp.lt.s32.totalorder %s16, 1
      %s828 = scalar_select %p827, %s16, 1
      %s829 = smul.addr %s828, 8
      %s830 = smul.addr %s829, 8
      %s831 = scalar_lea.vmem %s4, %s830
      // Predicated region
      $region37: #{skff_forward.1} parent=35 // pred_check
        %p832 = pneg %p123
      $region38: #{skff_forward.1} parent=35 // pred_check_branch
        %834 = sbr.rel (%p832) target = $region40
      $region39: #{skff_forward.1} parent=35 // pred_region
        _
      $region40: #{skff_forward.1} parent=35 // pred_fallthru
        _
    $region36: #{skff_forward.1} parent=5 // pred_fallthru
      _
    %p835 = scmp.le.s32.totalorder 2, %s11
    // Predicated region
    $region41: #{skff_forward.1} parent=5 // pred_check
      %p836 = pneg %p835
    $region42: #{skff_forward.1} parent=5 // pred_check_branch
      %838 = sbr.rel (%p836) target = $region44
    $region43: #{skff_forward.1} parent=5 // pred_region
      %s839 = ssub.s32 %s11, 2
      // Predicated region
      $region45: #{skff_forward.1} parent=43 // pred_check
        %p840 = pneg %p129
      $region46: #{skff_forward.1} parent=43 // pred_check_branch
        %842 = sbr.rel (%p840) target = $region48
      $region47: #{skff_forward.1} parent=43 // pred_region
        %p843 = scmp.lt.s32.totalorder %s17, 1
        %s844 = scalar_select %p843, %s17, 1
        %s845 = smul.addr %s844, 8
        %s846 = smul.addr %s845, 8
        %s847 = scalar_lea.vmem %s4, %s846
      $region48: #{skff_forward.1} parent=43 // pred_fallthru
        _
    $region44: #{skff_forward.1} parent=5 // pred_fallthru
      _
  $region6: #{skff_forward.1} parent=0 // loop_footer
    %s15 = sadd.s32 1, %s11
  $region7: #{skff_forward.1} parent=0 // loop_footer_branch
    %10 = sbr.rel target = $region3
  $region8: #{skff_forward.1} parent=0 // loop_exit
    _

</llo_original>
